<compile_context>
chip_gen: v6e
topology: v6e:2x2x1
jax: 0.10.0
libtpu: 0.0.40
codegen_flags: <defaults>
</compile_context>

<pallas_src>
import jax
import jax.numpy as jnp
from jax import lax
from jax.experimental import pallas as pl
from jax.experimental.pallas import tpu as pltpu

_LANES = 128
_SUBLANES = 8
_CHUNK = _LANES * _SUBLANES          # 1024 elements
_LOG_CLAMP = -100.0                  # PyTorch BCELoss clamps log(p)/log(1-p)


def _vmem_capacity_bytes():
    """Per-core VMEM capacity; conservative fallback (v7x = 64 MiB)."""
    try:
        return int(pltpu.get_tpu_info().vmem_capacity_bytes)
    except Exception:
        return 64 * 1024 * 1024


def _default_num_chunks():
    """One chunk per TensorCore: 2 on v7x, 1 on v5e/v6e (single TC)."""
    try:
        if "v7" in jax.devices()[0].device_kind.lower():
            return 2
    except Exception:
        pass
    return 1


def _make_kernel(steps, num_chunks, n_blocks, tm, rows):
    ragged = (rows % tm) != 0
    full_blocks = rows // tm                      # blocks fully inside the array
    exact = (not ragged) and (num_chunks * steps == n_blocks)

    def kernel(pred_ref, tgt_ref, out_ref):
        i = pl.program_id(1)

        @pl.when(i == 0)
        def _init():
            out_ref[...] = jnp.zeros_like(out_ref)

        def bce_term():
            p = pred_ref[...].astype(jnp.float32)
            t = tgt_ref[...].astype(jnp.float32)
            # Clamp BEFORE the multiply so padded zeros give 0*(-100) = 0,
            # never 0*(-inf) = NaN.
            log_p = jnp.maximum(jnp.log(p), _LOG_CLAMP)
            log_1mp = jnp.maximum(jnp.log1p(-p), _LOG_CLAMP)
            # t*log(p) + (1-t)*log(1-p) refactored to save ~3 VALU ops/elem;
            # the overall negation is applied once in the wrapper.
            return log_1mp + t * (log_p - log_1mp)

        def accumulate(term):
            # Fold TM rows onto the (8,128) resident accumulator: pure VPU adds,
            # reshape is a no-op sublane regrouping.
            out_ref[...] += jnp.sum(term.reshape(-1, _SUBLANES, _LANES), axis=0)

        if exact:
            # Common case: grid exactly covers the data -- zero masking overhead.
            accumulate(bce_term())
        else:
            b = pl.program_id(0) * steps + i      # logical block index

            @pl.when(b < full_blocks)             # fully-valid blocks
            def _full():
                accumulate(bce_term())

            if ragged:                            # single ragged last block
                @pl.when(b == n_blocks - 1)
                def _tail():
                    term = bce_term()
                    row0 = (n_blocks - 1) * tm
                    rid = row0 + lax.broadcasted_iota(jnp.int32, term.shape, 0)
                    accumulate(jnp.where(rid < rows, term, 0.0))
            # Blocks with b >= n_blocks (duplicate reads from a clamped index
            # map) simply contribute nothing.

    return kernel


def bce_loss_sum(prediction, target, *, num_chunks=None, max_block_rows=None):
    """nn.BCELoss(reduction='sum').

    prediction: float array of probabilities in [0, 1] (any shape / float dtype,
                bf16 is streamed as-is and accumulated in f32).
    target:     float array, same shape.
    Returns a float32 scalar.
    """
    pred = prediction.reshape(-1)
    tgt = target.reshape(-1)
    m = pred.shape[0]

    # Pad only up to the next multiple of 8*128 (<= 1023 zeros). When the
    # element count is already aligned (common case) this is a pure metadata
    # reshape -- no extra HBM copy. Block-level raggedness and the chunk split
    # are handled inside the kernel with masking, never with padding.
    m_pad = ((m + _CHUNK - 1) // _CHUNK) * _CHUNK
    if m_pad != m:
        pred = jnp.pad(pred, (0, m_pad - m))
        tgt = jnp.pad(tgt, (0, m_pad - m))
    rows = m_pad // _LANES                         # multiple of 8
    pred = pred.reshape(rows, _LANES)
    tgt = tgt.reshape(rows, _LANES)

    # Generation-aware block sizing: double-buffered inputs <= ~half of VMEM.
    #   v7x (64 MiB):  tm = 16384 (8 MiB/input block f32, 32 MiB pipelined)
    #   v5e/v6e (128): tm = 32768
    vmem_cap = _vmem_capacity_bytes()
    in_itemsize = pred.dtype.itemsize + tgt.dtype.itemsize
    bytes_per_row_pipelined = _LANES * 2 * in_itemsize   # 2 pipeline buffers
    tm = (vmem_cap // 2) // bytes_per_row_pipelined
    tm = max(32, (tm // 32) * 32)                  # mult of 32: f32/bf16/int8 OK
    if max_block_rows is not None:
        tm = min(tm, max(_SUBLANES, (max_block_rows // _SUBLANES) * _SUBLANES))
    tm = min(tm, rows)                             # never exceed the data

    n_blocks = (rows + tm - 1) // tm
    if num_chunks is None:
        num_chunks = _default_num_chunks()
    num_chunks = max(1, min(num_chunks, n_blocks))
    steps = (n_blocks + num_chunks - 1) // num_chunks

    if num_chunks * steps > n_blocks:
        # Clamp so DMAs stay in bounds; duplicate blocks are skipped in-kernel.
        in_map = lambda c, i: (jnp.minimum(c * steps + i, n_blocks - 1), 0)
    else:
        in_map = lambda c, i: (c * steps + i, 0)

    needed = 2 * tm * _LANES * in_itemsize         # double-buffered inputs
    vmem_limit = int(min(vmem_cap,
                         max(32 * 1024 * 1024, needed + 8 * 1024 * 1024)))

    kernel = _make_kernel(steps, num_chunks, n_blocks, tm, rows)

    partials = pl.pallas_call(
        kernel,
        out_shape=jax.ShapeDtypeStruct((num_chunks * _SUBLANES, _LANES),
                                       jnp.float32),
        grid_spec=pltpu.PrefetchScalarGridSpec(
            num_scalar_prefetch=0,
            grid=(num_chunks, steps),
            in_specs=[
                pl.BlockSpec((tm, _LANES), in_map),
                pl.BlockSpec((tm, _LANES), in_map),
            ],
            # Same block index for all i => per-chunk accumulator stays resident
            # in VMEM across the reduction axis; written back once per chunk.
            out_specs=pl.BlockSpec((_SUBLANES, _LANES), lambda c, i: (c, 0)),
        ),
        compiler_params=pltpu.CompilerParams(
            dimension_semantics=("parallel", "arbitrary"),
            vmem_limit_bytes=vmem_limit,
        ),
    )(pred, tgt)

    # Tiny final reduction + the single negation (instead of per-element negate).
    return -jnp.sum(partials)


def _bce_sum_ref(prediction, target):
    p = prediction.reshape(-1).astype(jnp.float32)
    t = target.reshape(-1).astype(jnp.float32)
    log_p = jnp.maximum(jnp.log(p), _LOG_CLAMP)
    log_1mp = jnp.maximum(jnp.log1p(-p), _LOG_CLAMP)
    return -jnp.sum(t * log_p + (1.0 - t) * log_1mp)


if __name__ == "__main__":
    key = jax.random.PRNGKey(0)
    k1, k2 = jax.random.split(key)

    # Small shapes consistent with an elementwise BCE loss on probabilities.
    N, C, H, W = 2, 4, 16, 16
    prediction = jax.nn.sigmoid(
        jax.random.normal(k1, (N, C, H, W), dtype=jnp.float32))
    target = jax.random.bernoulli(k2, 0.5, (N, C, H, W)).astype(jnp.float32)

    loss = bce_loss_sum(prediction, target)
    loss = jax.block_until_ready(loss)

    ref = _bce_sum_ref(prediction, target)
    assert jnp.allclose(loss, ref, rtol=1e-5, atol=1e-4), (loss, ref)

    print("KERNEL_OK")
</pallas_src>

<mosaic_0001>
module attributes {stable_mosaic.version = 11 : i64} {
  func.func @kernel(%arg0: i32, %arg1: i32, %arg2: memref<16x128xf32, #tpu.memory_space<vmem>>, %arg3: memref<16x128xf32, #tpu.memory_space<vmem>>, %arg4: memref<8x128xf32, #tpu.memory_space<vmem>>) attributes {dimension_semantics = [#tpu.dimension_semantics<parallel>, #tpu.dimension_semantics<arbitrary>], iteration_bounds = array<i64: 1, 1>, scalar_prefetch = 0 : i64, scratch_operands = 0 : i64, tpu.core_type = #tpu.core_type<tc>, window_params = [{transform_indices = @transform_0, window_bounds = array<i64: 16, 128>}, {transform_indices = @transform_1, window_bounds = array<i64: 16, 128>}, {transform_indices = @transform_2, window_bounds = array<i64: 8, 128>}]} {
    %c0_i32 = arith.constant 0 : i32
    %0 = arith.cmpi eq, %arg1, %c0_i32 : i32
    %1 = arith.extui %0 : i1 to i32
    %c0_i32_0 = arith.constant 0 : i32
    %2 = arith.cmpi ne, %1, %c0_i32_0 : i32
    scf.if %2 {
      %cst_11 = arith.constant 0.000000e+00 : f32
      %21 = vector.broadcast %cst_11 : f32 to vector<8x128xf32>
      %c0_12 = arith.constant 0 : index
      %c0_13 = arith.constant 0 : index
      %22 = vector.load %arg4[%c0_12, %c0_13] : memref<8x128xf32, #tpu.memory_space<vmem>>, vector<8x128xf32>
      tpu.vector_store %arg4[%c0_12, %c0_13], %21 {strides = array<i32>} : memref<8x128xf32, #tpu.memory_space<vmem>>, vector<8x128xf32>,
    } else {
    }
    %c0 = arith.constant 0 : index
    %c0_1 = arith.constant 0 : index
    %3 = vector.load %arg2[%c0, %c0_1] : memref<16x128xf32, #tpu.memory_space<vmem>>, vector<16x128xf32>
    %c0_2 = arith.constant 0 : index
    %c0_3 = arith.constant 0 : index
    %4 = vector.load %arg3[%c0_2, %c0_3] : memref<16x128xf32, #tpu.memory_space<vmem>>, vector<16x128xf32>
    %5 = math.log %3 : vector<16x128xf32>
    %cst = arith.constant -1.000000e+02 : f32
    %6 = vector.broadcast %cst : f32 to vector<16x128xf32>
    %7 = arith.maximumf %5, %6 : vector<16x128xf32>
    %cst_4 = arith.constant 0.000000e+00 : f32
    %8 = vector.broadcast %cst_4 : f32 to vector<16x128xf32>
    %9 = arith.subf %8, %3 : vector<16x128xf32>
    %10 = math.log1p %9 : vector<16x128xf32>
    %cst_5 = arith.constant -1.000000e+02 : f32
    %11 = vector.broadcast %cst_5 : f32 to vector<16x128xf32>
    %12 = arith.maximumf %10, %11 : vector<16x128xf32>
    %13 = arith.subf %7, %12 : vector<16x128xf32>
    %14 = arith.mulf %4, %13 : vector<16x128xf32>
    %15 = arith.addf %12, %14 : vector<16x128xf32>
    %c0_6 = arith.constant 0 : index
    %c0_7 = arith.constant 0 : index
    %16 = vector.load %arg4[%c0_6, %c0_7] : memref<8x128xf32, #tpu.memory_space<vmem>>, vector<8x128xf32>
    %17 = vector.shape_cast %15 : vector<16x128xf32> to vector<2x8x128xf32>
    %cst_8 = arith.constant dense<0.000000e+00> : vector<8x128xf32>
    %18 = vector.multi_reduction <add>, %17, %cst_8 [0] : vector<2x8x128xf32> to vector<8x128xf32>
    %19 = arith.addf %16, %18 : vector<8x128xf32>
    %c0_9 = arith.constant 0 : index
    %c0_10 = arith.constant 0 : index
    %20 = vector.load %arg4[%c0_9, %c0_10] : memref<8x128xf32, #tpu.memory_space<vmem>>, vector<8x128xf32>
    tpu.vector_store %arg4[%c0_9, %c0_10], %19 {strides = array<i32>} : memref<8x128xf32, #tpu.memory_space<vmem>>, vector<8x128xf32>,
    return
  }
  func.func @transform_0(%arg0: i32, %arg1: i32) -> (i32, i32) {
    %c1_i32 = arith.constant 1 : i32
    %0 = arith.muli %arg0, %c1_i32 : i32
    %1 = arith.addi %0, %arg1 : i32
    %c0_i32 = arith.constant 0 : i32
    %c0_i32_0 = arith.constant 0 : i32
    return %1, %c0_i32 : i32, i32
  }
  func.func @transform_1(%arg0: i32, %arg1: i32) -> (i32, i32) {
    %c1_i32 = arith.constant 1 : i32
    %0 = arith.muli %arg0, %c1_i32 : i32
    %1 = arith.addi %0, %arg1 : i32
    %c0_i32 = arith.constant 0 : i32
    %c0_i32_0 = arith.constant 0 : i32
    return %1, %c0_i32 : i32, i32
  }
  func.func @transform_2(%arg0: i32, %arg1: i32) -> (i32, i32) {
    %c0_i32 = arith.constant 0 : i32
    %c0_i32_0 = arith.constant 0 : i32
    return %arg0, %c0_i32 : i32, i32
  }
}

</mosaic_0001>

<llo_original>
// kernel: tpu_custom_call.1
$region0: #{tpu_custom_call.1}
  #allocation0 [shape = 'u32[]', space=smem, size = 0x4, offset = 0x4, fixed_abs, tag = 'smem constant byte address 0x4 - core index']
  #allocation1 [shape = 'u32[144,128]{1,0:T(1,128)}', space=vmem, size = 0x12000, scoped, tag = 'internal scratch']
  %s0 = inlined_call_operand.hbm [shape: f32[16,128], index: 0, kind: input, shape index: {}]
  %s1 = inlined_call_operand.hbm [shape: f32[16,128], index: 1, kind: input, shape index: {}]
  %s2 = inlined_call_operand.hbm [shape: f32[8,128], index: 2, kind: output, shape index: {}]
  %s3 = sld [smem:[#allocation0]]
  $region30: #{tpu_custom_call.1} parent=0
    _
  %s5 = ssub.s32 1, %s3
  %s6 = scalar_select 0, %s5, %s3
  $region1: #{tpu_custom_call.1} parent=0
    #allocation2 [shape = 'u8[8192]{0}', space=vmem, size = 0x2000, scoped, tag = 'input window, operand 0, single buffered']
    #allocation3 [shape = 's32[1]{0}', space=sflag, size = 0x4, scoped, tag = 'scoped memory for tpu_custom_call.1']
    #allocation4 [shape = 's32[1]{0}', space=sflag, size = 0x4, scoped, tag = 'scoped memory for tpu_custom_call.1']
    #allocation5 [shape = 'u8[8192]{0}', space=vmem, size = 0x2000, scoped, tag = 'input window, operand 1, single buffered']
    #allocation6 [shape = 's32[1]{0}', space=sflag, size = 0x4, scoped, tag = 'scoped memory for tpu_custom_call.1']
    #allocation7 [shape = 'u8[4096]{0}', space=vmem, size = 0x1000, scoped, tag = 'output window, operand 0, single buffered']
    %7 = vsyncpa [#allocation3], 0
    %8 = vsyncpa [#allocation6], 0
    %9 = vsyncpa [#allocation4], 0
    // Predicated region
    $region2: #{tpu_custom_call.1} parent=1 // pred_check
      _
    $region3: #{tpu_custom_call.1} parent=1 // pred_check_branch
      %11 = sbr.rel (0) target = $region5
    $region4: #{tpu_custom_call.1} parent=1 // pred_region
      %s12 = sadd.s32 0, 0
      %s13 = smul.u32 2, %s12
      %s15 = ssub.s32 256, 256
      %16 = vsyncadd [#allocation3], %s15
      %s17 = smul.addr %s13, 128
      %s18 = scalar_lea.hbm %s0, %s17
      %s19 = sshll.u32 [#allocation2], 4
      %s20 = int_to_ptr.vmem [resolvable:$true] %s19
      %25 = dma.hbm_to_vmem [thread:$0]  %s18, 256, %s20, [#allocation3], 128, 128, 8
    $region5: #{tpu_custom_call.1} parent=1 // pred_fallthru
      _
    // Predicated region
    $region6: #{tpu_custom_call.1} parent=1 // pred_check
      _
    $region7: #{tpu_custom_call.1} parent=1 // pred_check_branch
      %27 = sbr.rel (0) target = $region9
    $region8: #{tpu_custom_call.1} parent=1 // pred_region
      %s28 = sadd.s32 0, 0
      %s29 = smul.u32 2, %s28
      %s31 = ssub.s32 256, 256
      %32 = vsyncadd [#allocation6], %s31
      %s33 = smul.addr %s29, 128
      %s34 = scalar_lea.hbm %s1, %s33
      %s35 = sshll.u32 [#allocation5], 4
      %s36 = int_to_ptr.vmem [resolvable:$true] %s35
      %41 = dma.hbm_to_vmem [thread:$0]  %s34, 256, %s36, [#allocation6], 128, 128, 8
    $region9: #{tpu_custom_call.1} parent=1 // pred_fallthru
      _
    // Predicated region
    $region10: #{tpu_custom_call.1} parent=1 // pred_check
      _
    $region11: #{tpu_custom_call.1} parent=1 // pred_check_branch
      %43 = sbr.rel (0) target = $region13
    $region12: #{tpu_custom_call.1} parent=1 // pred_region
      %44 = dma.done [#allocation3], 256
    $region13: #{tpu_custom_call.1} parent=1 // pred_fallthru
      _
    // Predicated region
    $region14: #{tpu_custom_call.1} parent=1 // pred_check
      _
    $region15: #{tpu_custom_call.1} parent=1 // pred_check_branch
      %46 = sbr.rel (0) target = $region17
    $region16: #{tpu_custom_call.1} parent=1 // pred_region
      %47 = dma.done [#allocation6], 256
    $region17: #{tpu_custom_call.1} parent=1 // pred_fallthru
      _
    %s48 = sadd.s32 0, 0
    %s49 = smul.u32 2, %s48
    %s50 = sadd.s32 0, 0
    %s51 = smul.u32 2, %s50
    %p52 = scmp.eq.s32.totalorder 0, 0
    // Predicated region
    $region18: #{tpu_custom_call.1} parent=1 // pred_check
      %p53 = pneg %p52
    $region19: #{tpu_custom_call.1} parent=1 // pred_check_branch
      %55 = sbr.rel (%p53) target = $region21
    $region20: #{tpu_custom_call.1} parent=1 // pred_region
      %56 = vst [vmem:[#allocation7] sm:$0xff] 0.0
    $region21: #{tpu_custom_call.1} parent=1 // pred_fallthru
      _
    %v57 = vld [vmem:[#allocation2] sm:$0xff]
    %v58 = vld [vmem:[#allocation2 + $0x8] sm:$0xff]
    %v59 = vld [vmem:[#allocation5] sm:$0xff]
    %v60 = vld [vmem:[#allocation5 + $0x8] sm:$0xff]
    %v61 = vlog2.pop %v57
    %v62 = vmul.f32 %v61, 0.6931472
    %v63 = vlog2.pop %v58
    %v64 = vmul.f32 %v63, 0.6931472
    %v65 = vmax.f32 %v62, -100.0
    %v66 = vmax.f32 %v64, -100.0
    %v67 = vsub.f32 0.0, %v57
    %v68 = vsub.f32 0.0, %v58
    %v69 = vadd.f32 %v67, 1.0
    %v70 = vlog2.pop %v69
    %v71 = vmul.f32 %v70, 0.6931472
    %v72 = vmul.f32 -0.5, %v67
    %v73 = vadd.f32 %v72, 1.0
    %v74 = vmul.f32 %v73, %v67
    %v75 = vand.u32 2147483647, %v67
    %vm76 = vcmp.lt.f32.partialorder %v75, 0.0004427343
    %v77 = vsel %vm76, %v74, %v71
    %v78 = vadd.f32 %v68, 1.0
    %v79 = vlog2.pop %v78
    %v80 = vmul.f32 %v79, 0.6931472
    %v81 = vmul.f32 -0.5, %v68
    %v82 = vadd.f32 %v81, 1.0
    %v83 = vmul.f32 %v82, %v68
    %v84 = vand.u32 2147483647, %v68
    %vm85 = vcmp.lt.f32.partialorder %v84, 0.0004427343
    %v86 = vsel %vm85, %v83, %v80
    %v87 = vmax.f32 %v77, -100.0
    %v88 = vmax.f32 %v86, -100.0
    %v89 = vsub.f32 %v65, %v87
    %v90 = vsub.f32 %v66, %v88
    %v91 = vmul.f32 %v59, %v89
    %v92 = vmul.f32 %v60, %v90
    %v93 = vadd.f32 %v87, %v91
    %v94 = vadd.f32 %v88, %v92
    %v95 = vld [vmem:[#allocation7] sm:$0xff]
    %v96 = vadd.f32 %v93, %v94
    %v97 = vadd.f32 %v95, %v96
    %98 = vst [vmem:[#allocation7] sm:$0xff] %v97
    // Predicated region
    $region22: #{tpu_custom_call.1} parent=1 // pred_check
      _
    $region23: #{tpu_custom_call.1} parent=1 // pred_check_branch
      %100 = sbr.rel (0) target = $region25
    $region24: #{tpu_custom_call.1} parent=1 // pred_region
      %s102 = ssub.s32 128, 128
      %103 = vsyncadd [#allocation4], %s102
      %s105 = sshll.u32 [#allocation7], 4
      %s106 = int_to_ptr.vmem [resolvable:$true] %s105
      %108 = dma.vmem_to_hbm [thread:$0]  %s106, 128, %s2, [#allocation4]
    $region25: #{tpu_custom_call.1} parent=1 // pred_fallthru
      _
    // Predicated region
    $region26: #{tpu_custom_call.1} parent=1 // pred_check
      _
    $region27: #{tpu_custom_call.1} parent=1 // pred_check_branch
      %110 = sbr.rel (0) target = $region29
    $region28: #{tpu_custom_call.1} parent=1 // pred_region
      %111 = dma.done [#allocation4], 128
    $region29: #{tpu_custom_call.1} parent=1 // pred_fallthru
      _
    %112 = vsyncpa [#allocation3], 1
    %113 = vsyncpa [#allocation6], 1
    %114 = vsyncpa [#allocation4], 1

</llo_original>
